<compile_context>
chip_gen: v7x
topology: tpu7x:2x2x1
jax: 0.10.0
libtpu: 0.0.40
codegen_flags: <defaults>
</compile_context>

<pallas_src>
import numpy as np
import jax
import jax.numpy as jnp
from jax import lax
from jax.experimental import pallas as pl
from jax.experimental.pallas import tpu as pltpu


def qaoa_kernel(x_ref, m_ref, o_ref):
    """x_ref: (B, 2N) lane-packed [re | im].  m_ref: (dep, 2N, 2N) real block mixers."""
    dep = m_ref.shape[0]
    state = x_ref[...]                                   # (B, 2N)

    def body(d, st):
        # One MXU matmul per depth; output stays lane-packed [re | im].
        return jnp.dot(st, m_ref[d], preferred_element_type=jnp.float32)

    o_ref[...] = lax.fori_loop(0, dep, body, state, unroll=True)


def dropout_qaoa_forward(x_re, x_im, mix_block):
    """x_re/x_im: (B, N) f32 state planes.  mix_block: (dep, 2N, 2N) f32 block mixers."""
    B, N = x_re.shape
    dep = mix_block.shape[0]
    x = jnp.concatenate([x_re, x_im], axis=1)            # (B, 2N) lane-packed
    out = pl.pallas_call(
        qaoa_kernel,
        out_shape=jax.ShapeDtypeStruct((B, 2 * N), jnp.float32),
        grid_spec=pltpu.PrefetchScalarGridSpec(
            num_scalar_prefetch=0,
            grid=(1,),
            in_specs=[
                pl.BlockSpec((B, 2 * N), lambda i: (0, 0)),
                pl.BlockSpec((dep, 2 * N, 2 * N), lambda i: (0, 0, 0)),
            ],
            out_specs=pl.BlockSpec((B, 2 * N), lambda i: (0, 0)),
        ),
        compiler_params=pltpu.CompilerParams(
            dimension_semantics=("arbitrary",)),
    )(x, mix_block)
    return out[:, :N], out[:, N:]
    # TODO(synk): for size >= ~11 the dense (2N, 2N) block mixer no longer fits whole in
    # VMEM (esp. v7x's 64 MiB); there, reintroduce a K-tiled contraction grid or switch
    # to the Kronecker butterfly (pltpu.roll) formulation of the X mixer.


def build_params(size, spec, dep):
    """Fold each depth's diagonal Ising phase into its dense X-mixer and pack as the
    real (2N, 2N) block embedding [[Re, Im], [-Im, Re]].

    Mirrors DropOutQAOA.__init__ parameter construction (t=(p+1)/(dep+1), mixer time 1-t).
    Returns (dep, 2N, 2N) float32.
    """
    N = 2 ** size
    spec_np = np.asarray(spec, dtype=np.float64)
    mats = []
    for x in range(dep):
        t = (x + 1) / (dep + 1)
        d = np.exp(-1j * t * spec_np)                    # (N,) phase diag exp(-i t spec)
        tm = 1.0 - t
        c, s = np.cos(tm), np.sin(tm)
        u1 = np.array([[c, -1j * s], [-1j * s, c]], dtype=np.complex128)
        U = np.array([[1.0 + 0j]], dtype=np.complex128)
        for _ in range(size):
            U = np.kron(U, u1)                           # full X-mixer unitary
        M = d[:, None] * U                               # diag(d) @ U  (phase folded in)
        top = np.concatenate([M.real, M.imag], axis=1)   # [ Re | Im]
        bot = np.concatenate([-M.imag, M.real], axis=1)  # [-Im | Re]
        mats.append(np.concatenate([top, bot], axis=0).astype(np.float32))  # (2N, 2N)
    return jnp.asarray(np.stack(mats))                   # (dep, 2N, 2N)


def reference_forward(x, spec, size, dep):
    """Pure-JAX reference: diagonal phase + sequential per-qubit X rotations."""
    N = 2 ** size
    B = x.shape[0]
    for d in range(dep):
        t = (d + 1) / (dep + 1)
        x = x * jnp.exp(-1j * t * spec)
        tm = 1.0 - t
        c, s = jnp.cos(tm), jnp.sin(tm)
        for q in range(size):
            xr = x.reshape(B, N >> (q + 1), 2, 1 << q)
            swapped = xr[:, :, ::-1, :]
            xr = c * xr - 1j * s * swapped
            x = xr.reshape(B, N)
    return x


# TODO(synk): state-dict utilities (loadParams / loadDrivenParams / affineDrivenParams /
# specSetup / randIni / reset) only mutate parameters, not the forward dataflow; they are
# represented here by rebuilding the packed block mixers via build_params().

if __name__ == "__main__":
    size, dep = 7, 3          # 7 qubits -> state dim 128 (one lane width), QAOA depth 3
    N = 2 ** size
    B = 8                     # batch of quantum states (one sublane tile)
    key = jax.random.PRNGKey(0)
    k1, k2, k3 = jax.random.split(key, 3)
    # 'spec': diagonal Ising/SAT cost spectrum buffer of the DynaEvoIsingLayer
    spec = jax.random.uniform(k1, (N,), jnp.float32, 0.0, 4.0)
    # input quantum state (normalized complex amplitudes), split into real/imag planes
    xr = jax.random.normal(k2, (B, N), jnp.float32)
    xi = jax.random.normal(k3, (B, N), jnp.float32)
    norm = jnp.sqrt(jnp.sum(xr ** 2 + xi ** 2, axis=-1, keepdims=True))
    xr, xi = xr / norm, xi / norm

    mix_block = build_params(size, spec, dep)
    ore, oim = dropout_qaoa_forward(xr, xi, mix_block)
    ore = jax.block_until_ready(ore)
    oim = jax.block_until_ready(oim)

    ref = reference_forward(xr + 1j * xi, spec, size, dep)
    np.testing.assert_allclose(np.asarray(ore), np.asarray(ref.real), atol=1e-4, rtol=1e-4)
    np.testing.assert_allclose(np.asarray(oim), np.asarray(ref.imag), atol=1e-4, rtol=1e-4)
    print("KERNEL_OK")
</pallas_src>

<mosaic_0001>
module attributes {stable_mosaic.version = 11 : i64} {
  func.func @qaoa_kernel(%arg0: i32, %arg1: memref<8x256xf32, #tpu.memory_space<vmem>>, %arg2: memref<3x256x256xf32, #tpu.memory_space<vmem>>, %arg3: memref<8x256xf32, #tpu.memory_space<vmem>>) attributes {dimension_semantics = [#tpu.dimension_semantics<arbitrary>], iteration_bounds = array<i64: 1>, scalar_prefetch = 0 : i64, scratch_operands = 0 : i64, tpu.core_type = #tpu.core_type<tc>, window_params = [{pipeline_mode = #tpu.pipeline_mode<synchronous>, transform_indices = @transform_0, window_bounds = array<i64: 8, 256>}, {pipeline_mode = #tpu.pipeline_mode<synchronous>, transform_indices = @transform_1, window_bounds = array<i64: 3, 256, 256>}, {pipeline_mode = #tpu.pipeline_mode<synchronous>, transform_indices = @transform_2, window_bounds = array<i64: 8, 256>}]} {
    %c0 = arith.constant 0 : index
    %c0_0 = arith.constant 0 : index
    %0 = vector.load %arg1[%c0, %c0_0] : memref<8x256xf32, #tpu.memory_space<vmem>>, vector<8x256xf32>
    %c0_i32 = arith.constant 0 : i32
    %1 = arith.index_cast %c0_i32 : i32 to index
    %c0_1 = arith.constant 0 : index
    %c0_2 = arith.constant 0 : index
    %2 = vector.load %arg2[%1, %c0_1, %c0_2] : memref<3x256x256xf32, #tpu.memory_space<vmem>>, vector<1x256x256xf32>
    %3 = vector.shape_cast %2 : vector<1x256x256xf32> to vector<256x256xf32>
    %cst = arith.constant dense<0.000000e+00> : vector<8x256xf32>
    %4 = tpu.matmul %0, %3, %cst {dimension_numbers = #tpu.dot_dimension_numbers<[1], [0], [0], [1], [0, 0, 1, 1], [], []>} : vector<8x256xf32>, vector<256x256xf32>, vector<8x256xf32> -> vector<8x256xf32>
    %c1_i32 = arith.constant 1 : i32
    %5 = arith.index_cast %c1_i32 : i32 to index
    %c0_3 = arith.constant 0 : index
    %c0_4 = arith.constant 0 : index
    %6 = vector.load %arg2[%5, %c0_3, %c0_4] : memref<3x256x256xf32, #tpu.memory_space<vmem>>, vector<1x256x256xf32>
    %7 = vector.shape_cast %6 : vector<1x256x256xf32> to vector<256x256xf32>
    %cst_5 = arith.constant dense<0.000000e+00> : vector<8x256xf32>
    %8 = tpu.matmul %4, %7, %cst_5 {dimension_numbers = #tpu.dot_dimension_numbers<[1], [0], [0], [1], [0, 0, 1, 1], [], []>} : vector<8x256xf32>, vector<256x256xf32>, vector<8x256xf32> -> vector<8x256xf32>
    %c2_i32 = arith.constant 2 : i32
    %9 = arith.index_cast %c2_i32 : i32 to index
    %c0_6 = arith.constant 0 : index
    %c0_7 = arith.constant 0 : index
    %10 = vector.load %arg2[%9, %c0_6, %c0_7] : memref<3x256x256xf32, #tpu.memory_space<vmem>>, vector<1x256x256xf32>
    %11 = vector.shape_cast %10 : vector<1x256x256xf32> to vector<256x256xf32>
    %cst_8 = arith.constant dense<0.000000e+00> : vector<8x256xf32>
    %12 = tpu.matmul %8, %11, %cst_8 {dimension_numbers = #tpu.dot_dimension_numbers<[1], [0], [0], [1], [0, 0, 1, 1], [], []>} : vector<8x256xf32>, vector<256x256xf32>, vector<8x256xf32> -> vector<8x256xf32>
    %c3_i32 = arith.constant 3 : i32
    %c0_9 = arith.constant 0 : index
    %c0_10 = arith.constant 0 : index
    %13 = vector.load %arg3[%c0_9, %c0_10] : memref<8x256xf32, #tpu.memory_space<vmem>>, vector<8x256xf32>
    tpu.vector_store %arg3[%c0_9, %c0_10], %12 {strides = array<i32>} : memref<8x256xf32, #tpu.memory_space<vmem>>, vector<8x256xf32>,
    return
  }
  func.func @transform_0(%arg0: i32) -> (i32, i32) {
    %c0_i32 = arith.constant 0 : i32
    %c0_i32_0 = arith.constant 0 : i32
    %c0_i32_1 = arith.constant 0 : i32
    return %c0_i32, %c0_i32_0 : i32, i32
  }
  func.func @transform_1(%arg0: i32) -> (i32, i32, i32) {
    %c0_i32 = arith.constant 0 : i32
    %c0_i32_0 = arith.constant 0 : i32
    %c0_i32_1 = arith.constant 0 : i32
    %c0_i32_2 = arith.constant 0 : i32
    return %c0_i32, %c0_i32_0, %c0_i32_1 : i32, i32, i32
  }
  func.func @transform_2(%arg0: i32) -> (i32, i32) {
    %c0_i32 = arith.constant 0 : i32
    %c0_i32_0 = arith.constant 0 : i32
    %c0_i32_1 = arith.constant 0 : i32
    return %c0_i32, %c0_i32_0 : i32, i32
  }
}

</mosaic_0001>

<llo_original>
// kernel: tpu_custom_call.1
$region0: #{tpu_custom_call.1}
  #allocation0 [shape = 'u32[]', space=smem, size = 0x4, offset = 0x4, fixed_abs, tag = 'smem constant byte address 0x4 - core index']
  #allocation1 [shape = 'u32[144,128]{1,0:T(1,128)}', space=vmem, size = 0x12000, scoped, tag = 'internal scratch']
  %s0 = inlined_call_operand.hbm [shape: f32[8,256], index: 0, kind: input, shape index: {}]
  %s1 = inlined_call_operand.hbm [shape: f32[3,256,256], index: 1, kind: input, shape index: {}]
  %s2 = inlined_call_operand.hbm [shape: f32[8,256], index: 2, kind: output, shape index: {}]
  %s3 = sld [smem:[#allocation0]]
  $region26: #{tpu_custom_call.1} parent=0
    _
  %s5 = ssub.s32 1, %s3
  %s6 = scalar_select 0, %s5, %s3
  $region1: #{tpu_custom_call.1} parent=0
    #allocation2 [shape = 'u8[8192]{0}', space=vmem, size = 0x2000, scoped, tag = 'input window, operand 0, single buffered']
    #allocation3 [shape = 's32[1]{0}', space=sflag, size = 0x4, scoped, tag = 'scoped memory for tpu_custom_call.1']
    #allocation4 [shape = 's32[1]{0}', space=sflag, size = 0x4, scoped, tag = 'scoped memory for tpu_custom_call.1']
    #allocation5 [shape = 'u8[786432]{0}', space=vmem, size = 0xc0000, scoped, tag = 'input window, operand 1, single buffered']
    #allocation6 [shape = 's32[1]{0}', space=sflag, size = 0x4, scoped, tag = 'scoped memory for tpu_custom_call.1']
    #allocation7 [shape = 'u8[8192]{0}', space=vmem, size = 0x2000, scoped, tag = 'output window, operand 0, single buffered']
    %7 = vsyncpa [#allocation3], 0
    %8 = vsyncpa [#allocation6], 0
    %9 = vsyncpa [#allocation4], 0
    // Predicated region
    $region2: #{tpu_custom_call.1} parent=1 // pred_check
      _
    $region3: #{tpu_custom_call.1} parent=1 // pred_check_branch
      %11 = sbr.rel (0) target = $region5
    $region4: #{tpu_custom_call.1} parent=1 // pred_region
      %s13 = ssub.s32 256, 256
      %14 = vsyncadd [#allocation3], %s13
      %s16 = sshll.u32 [#allocation2], 4
      %s17 = int_to_ptr.vmem [resolvable:$true] %s16
      %19 = dma.hbm_to_vmem [thread:$0]  %s0, 256, %s17, [#allocation3]
    $region5: #{tpu_custom_call.1} parent=1 // pred_fallthru
      _
    // Predicated region
    $region6: #{tpu_custom_call.1} parent=1 // pred_check
      _
    $region7: #{tpu_custom_call.1} parent=1 // pred_check_branch
      %21 = sbr.rel (0) target = $region9
    $region8: #{tpu_custom_call.1} parent=1 // pred_region
      %s23 = ssub.s32 24576, 24576
      %24 = vsyncadd [#allocation6], %s23
      %s25 = sshll.u32 [#allocation5], 4
      %s26 = int_to_ptr.vmem [resolvable:$true] %s25
      %31 = dma.hbm_to_vmem [thread:$0]  %s1, 24576, %s26, [#allocation6], 256, 256, 16
    $region9: #{tpu_custom_call.1} parent=1 // pred_fallthru
      _
    // Predicated region
    $region10: #{tpu_custom_call.1} parent=1 // pred_check
      _
    $region11: #{tpu_custom_call.1} parent=1 // pred_check_branch
      %33 = sbr.rel (0) target = $region13
    $region12: #{tpu_custom_call.1} parent=1 // pred_region
      %34 = dma.done [#allocation3], 256
    $region13: #{tpu_custom_call.1} parent=1 // pred_fallthru
      _
    // Predicated region
    $region14: #{tpu_custom_call.1} parent=1 // pred_check
      _
    $region15: #{tpu_custom_call.1} parent=1 // pred_check_branch
      %36 = sbr.rel (0) target = $region17
    $region16: #{tpu_custom_call.1} parent=1 // pred_region
      %37 = dma.done [#allocation6], 24576
    $region17: #{tpu_custom_call.1} parent=1 // pred_fallthru
      _
    %v38 = vld [vmem:[#allocation2] sm:$0xff]
    %v39 = vld [vmem:[#allocation2 + $0x8] sm:$0xff]
    %v40 = vld [vmem:[#allocation5] sm:$0xff]
    %v41 = vld [vmem:[#allocation5 + $0x8] sm:$0xff]
    %v42 = vld [vmem:[#allocation5 + $0x10] sm:$0xff]
    %v43 = vld [vmem:[#allocation5 + $0x18] sm:$0xff]
    %v44 = vld [vmem:[#allocation5 + $0x20] sm:$0xff]
    %v45 = vld [vmem:[#allocation5 + $0x28] sm:$0xff]
    %v46 = vld [vmem:[#allocation5 + $0x30] sm:$0xff]
    %v47 = vld [vmem:[#allocation5 + $0x38] sm:$0xff]
    %v48 = vld [vmem:[#allocation5 + $0x40] sm:$0xff]
    %v49 = vld [vmem:[#allocation5 + $0x48] sm:$0xff]
    %v50 = vld [vmem:[#allocation5 + $0x50] sm:$0xff]
    %v51 = vld [vmem:[#allocation5 + $0x58] sm:$0xff]
    %v52 = vld [vmem:[#allocation5 + $0x60] sm:$0xff]
    %v53 = vld [vmem:[#allocation5 + $0x68] sm:$0xff]
    %v54 = vld [vmem:[#allocation5 + $0x70] sm:$0xff]
    %v55 = vld [vmem:[#allocation5 + $0x78] sm:$0xff]
    %v56 = vld [vmem:[#allocation5 + $0x80] sm:$0xff]
    %v57 = vld [vmem:[#allocation5 + $0x88] sm:$0xff]
    %v58 = vld [vmem:[#allocation5 + $0x90] sm:$0xff]
    %v59 = vld [vmem:[#allocation5 + $0x98] sm:$0xff]
    %v60 = vld [vmem:[#allocation5 + $0xa0] sm:$0xff]
    %v61 = vld [vmem:[#allocation5 + $0xa8] sm:$0xff]
    %v62 = vld [vmem:[#allocation5 + $0xb0] sm:$0xff]
    %v63 = vld [vmem:[#allocation5 + $0xb8] sm:$0xff]
    %v64 = vld [vmem:[#allocation5 + $0xc0] sm:$0xff]
    %v65 = vld [vmem:[#allocation5 + $0xc8] sm:$0xff]
    %v66 = vld [vmem:[#allocation5 + $0xd0] sm:$0xff]
    %v67 = vld [vmem:[#allocation5 + $0xd8] sm:$0xff]
    %v68 = vld [vmem:[#allocation5 + $0xe0] sm:$0xff]
    %v69 = vld [vmem:[#allocation5 + $0xe8] sm:$0xff]
    %v70 = vld [vmem:[#allocation5 + $0xf0] sm:$0xff]
    %v71 = vld [vmem:[#allocation5 + $0xf8] sm:$0xff]
    %v72 = vld [vmem:[#allocation5 + $0x100] sm:$0xff]
    %v73 = vld [vmem:[#allocation5 + $0x108] sm:$0xff]
    %v74 = vld [vmem:[#allocation5 + $0x110] sm:$0xff]
    %v75 = vld [vmem:[#allocation5 + $0x118] sm:$0xff]
    %v76 = vld [vmem:[#allocation5 + $0x120] sm:$0xff]
    %v77 = vld [vmem:[#allocation5 + $0x128] sm:$0xff]
    %v78 = vld [vmem:[#allocation5 + $0x130] sm:$0xff]
    %v79 = vld [vmem:[#allocation5 + $0x138] sm:$0xff]
    %v80 = vld [vmem:[#allocation5 + $0x140] sm:$0xff]
    %v81 = vld [vmem:[#allocation5 + $0x148] sm:$0xff]
    %v82 = vld [vmem:[#allocation5 + $0x150] sm:$0xff]
    %v83 = vld [vmem:[#allocation5 + $0x158] sm:$0xff]
    %v84 = vld [vmem:[#allocation5 + $0x160] sm:$0xff]
    %v85 = vld [vmem:[#allocation5 + $0x168] sm:$0xff]
    %v86 = vld [vmem:[#allocation5 + $0x170] sm:$0xff]
    %v87 = vld [vmem:[#allocation5 + $0x178] sm:$0xff]
    %v88 = vld [vmem:[#allocation5 + $0x180] sm:$0xff]
    %v89 = vld [vmem:[#allocation5 + $0x188] sm:$0xff]
    %v90 = vld [vmem:[#allocation5 + $0x190] sm:$0xff]
    %v91 = vld [vmem:[#allocation5 + $0x198] sm:$0xff]
    %v92 = vld [vmem:[#allocation5 + $0x1a0] sm:$0xff]
    %v93 = vld [vmem:[#allocation5 + $0x1a8] sm:$0xff]
    %v94 = vld [vmem:[#allocation5 + $0x1b0] sm:$0xff]
    %v95 = vld [vmem:[#allocation5 + $0x1b8] sm:$0xff]
    %v96 = vld [vmem:[#allocation5 + $0x1c0] sm:$0xff]
    %v97 = vld [vmem:[#allocation5 + $0x1c8] sm:$0xff]
    %v98 = vld [vmem:[#allocation5 + $0x1d0] sm:$0xff]
    %v99 = vld [vmem:[#allocation5 + $0x1d8] sm:$0xff]
    %v100 = vld [vmem:[#allocation5 + $0x1e0] sm:$0xff]
    %v101 = vld [vmem:[#allocation5 + $0x1e8] sm:$0xff]
    %v102 = vld [vmem:[#allocation5 + $0x1f0] sm:$0xff]
    %v103 = vld [vmem:[#allocation5 + $0x1f8] sm:$0xff]
    %104 = vmatprep.subr.mxu0 %v41
    %105 = vmatpush1.msra.mxu0 %v40
    %106 = vmatprep.subr.mxu0 %v43
    %107 = vmatpush1.msra.mxu0 %v42
    %108 = vmatprep.subr.mxu0 %v45
    %109 = vmatpush1.msra.mxu0 %v44
    %110 = vmatprep.subr.mxu0 %v47
    %111 = vmatpush1.msra.mxu0 %v46
    %112 = vmatprep.subr.mxu0 %v49
    %113 = vmatpush1.msra.mxu0 %v48
    %114 = vmatprep.subr.mxu0 %v51
    %115 = vmatpush1.msra.mxu0 %v50
    %116 = vmatprep.subr.mxu0 %v53
    %117 = vmatpush1.msra.mxu0 %v52
    %118 = vmatprep.subr.mxu0 %v55
    %119 = vmatpush1.msra.mxu0 %v54
    %120 = vmatprep.subr.mxu0 %v57
    %121 = vmatpush1.msra.mxu0 %v56
    %122 = vmatprep.subr.mxu0 %v59
    %123 = vmatpush1.msra.mxu0 %v58
    %124 = vmatprep.subr.mxu0 %v61
    %125 = vmatpush1.msra.mxu0 %v60
    %126 = vmatprep.subr.mxu0 %v63
    %127 = vmatpush1.msra.mxu0 %v62
    %128 = vmatprep.subr.mxu0 %v65
    %129 = vmatpush1.msra.mxu0 %v64
    %130 = vmatprep.subr.mxu0 %v67
    %131 = vmatpush1.msra.mxu0 %v66
    %132 = vmatprep.subr.mxu0 %v69
    %133 = vmatpush1.msra.mxu0 %v68
    %134 = vmatprep.subr.mxu0 %v71
    %135 = vmatpush1.msra.mxu0 %v70
    %136 = vmatprep.subr.mxu0 %v73
    %137 = vmatpush1.msra.mxu0 %v72
    %138 = vmatprep.subr.mxu0 %v75
    %139 = vmatpush1.msra.mxu0 %v74
    %140 = vmatprep.subr.mxu0 %v77
    %141 = vmatpush1.msra.mxu0 %v76
    %142 = vmatprep.subr.mxu0 %v79
    %143 = vmatpush1.msra.mxu0 %v78
    %144 = vmatprep.subr.mxu0 %v81
    %145 = vmatpush1.msra.mxu0 %v80
    %146 = vmatprep.subr.mxu0 %v83
    %147 = vmatpush1.msra.mxu0 %v82
    %148 = vmatprep.subr.mxu0 %v85
    %149 = vmatpush1.msra.mxu0 %v84
    %150 = vmatprep.subr.mxu0 %v87
    %151 = vmatpush1.msra.mxu0 %v86
    %152 = vmatprep.subr.mxu0 %v89
    %153 = vmatpush1.msra.mxu0 %v88
    %154 = vmatprep.subr.mxu0 %v91
    %155 = vmatpush1.msra.mxu0 %v90
    %156 = vmatprep.subr.mxu0 %v93
    %157 = vmatpush1.msra.mxu0 %v92
    %158 = vmatprep.subr.mxu0 %v95
    %159 = vmatpush1.msra.mxu0 %v94
    %160 = vmatprep.subr.mxu0 %v97
    %161 = vmatpush1.msra.mxu0 %v96
    %162 = vmatprep.subr.mxu0 %v99
    %163 = vmatpush1.msra.mxu0 %v98
    %164 = vmatprep.subr.mxu0 %v101
    %165 = vmatpush1.msra.mxu0 %v100
    %166 = vmatprep.subr.mxu0 %v103
    %167 = vmatpush1.msra.mxu0 %v102
    %168 = vmatprep.mubr.f32.mxu0 %v39
    %169 = vmatmul.mubr.f32.gmra.mrb[0].mxu0 %v38
    %v170 = vpop.f32.mrb[0].mxu0
    %v171 = vadd.f32 0.0, %v170
    %v172 = vpop.f32.mrb[0].mxu0
    %v173 = vadd.f32 0.0, %v172
    %174 = vdwg.mxu0
    %s175 = scalar_lea.vmem [#allocation5], 512
    %v176 = vld [vmem:[%s175] sm:$0xff]
    %v177 = vld [vmem:[%s175 + $0x8] sm:$0xff]
    %v178 = vld [vmem:[%s175 + $0x10] sm:$0xff]
    %v179 = vld [vmem:[%s175 + $0x18] sm:$0xff]
    %v180 = vld [vmem:[%s175 + $0x20] sm:$0xff]
    %v181 = vld [vmem:[%s175 + $0x28] sm:$0xff]
    %v182 = vld [vmem:[%s175 + $0x30] sm:$0xff]
    %v183 = vld [vmem:[%s175 + $0x38] sm:$0xff]
    %v184 = vld [vmem:[%s175 + $0x40] sm:$0xff]
    %v185 = vld [vmem:[%s175 + $0x48] sm:$0xff]
    %v186 = vld [vmem:[%s175 + $0x50] sm:$0xff]
    %v187 = vld [vmem:[%s175 + $0x58] sm:$0xff]
    %v188 = vld [vmem:[%s175 + $0x60] sm:$0xff]
    %v189 = vld [vmem:[%s175 + $0x68] sm:$0xff]
    %v190 = vld [vmem:[%s175 + $0x70] sm:$0xff]
    %v191 = vld [vmem:[%s175 + $0x78] sm:$0xff]
    %v192 = vld [vmem:[%s175 + $0x80] sm:$0xff]
    %v193 = vld [vmem:[%s175 + $0x88] sm:$0xff]
    %v194 = vld [vmem:[%s175 + $0x90] sm:$0xff]
    %v195 = vld [vmem:[%s175 + $0x98] sm:$0xff]
    %v196 = vld [vmem:[%s175 + $0xa0] sm:$0xff]
    %v197 = vld [vmem:[%s175 + $0xa8] sm:$0xff]
    %v198 = vld [vmem:[%s175 + $0xb0] sm:$0xff]
    %v199 = vld [vmem:[%s175 + $0xb8] sm:$0xff]
    %v200 = vld [vmem:[%s175 + $0xc0] sm:$0xff]
    %v201 = vld [vmem:[%s175 + $0xc8] sm:$0xff]
    %v202 = vld [vmem:[%s175 + $0xd0] sm:$0xff]
    %v203 = vld [vmem:[%s175 + $0xd8] sm:$0xff]
    %v204 = vld [vmem:[%s175 + $0xe0] sm:$0xff]
    %v205 = vld [vmem:[%s175 + $0xe8] sm:$0xff]
    %v206 = vld [vmem:[%s175 + $0xf0] sm:$0xff]
    %v207 = vld [vmem:[%s175 + $0xf8] sm:$0xff]
    %v208 = vld [vmem:[%s175 + $0x100] sm:$0xff]
    %v209 = vld [vmem:[%s175 + $0x108] sm:$0xff]
    %v210 = vld [vmem:[%s175 + $0x110] sm:$0xff]
    %v211 = vld [vmem:[%s175 + $0x118] sm:$0xff]
    %v212 = vld [vmem:[%s175 + $0x120] sm:$0xff]
    %v213 = vld [vmem:[%s175 + $0x128] sm:$0xff]
    %v214 = vld [vmem:[%s175 + $0x130] sm:$0xff]
    %v215 = vld [vmem:[%s175 + $0x138] sm:$0xff]
    %v216 = vld [vmem:[%s175 + $0x140] sm:$0xff]
    %v217 = vld [vmem:[%s175 + $0x148] sm:$0xff]
    %v218 = vld [vmem:[%s175 + $0x150] sm:$0xff]
    %v219 = vld [vmem:[%s175 + $0x158] sm:$0xff]
    %v220 = vld [vmem:[%s175 + $0x160] sm:$0xff]
    %v221 = vld [vmem:[%s175 + $0x168] sm:$0xff]
    %v222 = vld [vmem:[%s175 + $0x170] sm:$0xff]
    %v223 = vld [vmem:[%s175 + $0x178] sm:$0xff]
    %v224 = vld [vmem:[%s175 + $0x180] sm:$0xff]
    %v225 = vld [vmem:[%s175 + $0x188] sm:$0xff]
    %v226 = vld [vmem:[%s175 + $0x190] sm:$0xff]
    %v227 = vld [vmem:[%s175 + $0x198] sm:$0xff]
    %v228 = vld [vmem:[%s175 + $0x1a0] sm:$0xff]
    %v229 = vld [vmem:[%s175 + $0x1a8] sm:$0xff]
    %v230 = vld [vmem:[%s175 + $0x1b0] sm:$0xff]
    %v231 = vld [vmem:[%s175 + $0x1b8] sm:$0xff]
    %v232 = vld [vmem:[%s175 + $0x1c0] sm:$0xff]
    %v233 = vld [vmem:[%s175 + $0x1c8] sm:$0xff]
    %v234 = vld [vmem:[%s175 + $0x1d0] sm:$0xff]
    %v235 = vld [vmem:[%s175 + $0x1d8] sm:$0xff]
    %v236 = vld [vmem:[%s175 + $0x1e0] sm:$0xff]
    %v237 = vld [vmem:[%s175 + $0x1e8] sm:$0xff]
    %v238 = vld [vmem:[%s175 + $0x1f0] sm:$0xff]
    %v239 = vld [vmem:[%s175 + $0x1f8] sm:$0xff]
    %240 = vmatprep.subr.mxu0 %v177
    %241 = vmatpush1.msra.mxu0 %v176
    %242 = vmatprep.subr.mxu0 %v179
    %243 = vmatpush1.msra.mxu0 %v178
    %244 = vmatprep.subr.mxu0 %v181
    %245 = vmatpush1.msra.mxu0 %v180
    %246 = vmatprep.subr.mxu0 %v183
    %247 = vmatpush1.msra.mxu0 %v182
    %248 = vmatprep.subr.mxu0 %v185
    %249 = vmatpush1.msra.mxu0 %v184
    %250 = vmatprep.subr.mxu0 %v187
    %251 = vmatpush1.msra.mxu0 %v186
    %252 = vmatprep.subr.mxu0 %v189
    %253 = vmatpush1.msra.mxu0 %v188
    %254 = vmatprep.subr.mxu0 %v191
    %255 = vmatpush1.msra.mxu0 %v190
    %256 = vmatprep.subr.mxu0 %v193
    %257 = vmatpush1.msra.mxu0 %v192
    %258 = vmatprep.subr.mxu0 %v195
    %259 = vmatpush1.msra.mxu0 %v194
    %260 = vmatprep.subr.mxu0 %v197
    %261 = vmatpush1.msra.mxu0 %v196
    %262 = vmatprep.subr.mxu0 %v199
    %263 = vmatpush1.msra.mxu0 %v198
    %264 = vmatprep.subr.mxu0 %v201
    %265 = vmatpush1.msra.mxu0 %v200
    %266 = vmatprep.subr.mxu0 %v203
    %267 = vmatpush1.msra.mxu0 %v202
    %268 = vmatprep.subr.mxu0 %v205
    %269 = vmatpush1.msra.mxu0 %v204
    %270 = vmatprep.subr.mxu0 %v207
    %271 = vmatpush1.msra.mxu0 %v206
    %272 = vmatprep.subr.mxu0 %v209
    %273 = vmatpush1.msra.mxu0 %v208
    %274 = vmatprep.subr.mxu0 %v211
    %275 = vmatpush1.msra.mxu0 %v210
    %276 = vmatprep.subr.mxu0 %v213
    %277 = vmatpush1.msra.mxu0 %v212
    %278 = vmatprep.subr.mxu0 %v215
    %279 = vmatpush1.msra.mxu0 %v214
    %280 = vmatprep.subr.mxu0 %v217
    %281 = vmatpush1.msra.mxu0 %v216
    %282 = vmatprep.subr.mxu0 %v219
    %283 = vmatpush1.msra.mxu0 %v218
    %284 = vmatprep.subr.mxu0 %v221
    %285 = vmatpush1.msra.mxu0 %v220
    %286 = vmatprep.subr.mxu0 %v223
    %287 = vmatpush1.msra.mxu0 %v222
    %288 = vmatprep.subr.mxu0 %v225
    %289 = vmatpush1.msra.mxu0 %v224
    %290 = vmatprep.subr.mxu0 %v227
    %291 = vmatpush1.msra.mxu0 %v226
    %292 = vmatprep.subr.mxu0 %v229
    %293 = vmatpush1.msra.mxu0 %v228
    %294 = vmatprep.subr.mxu0 %v231
    %295 = vmatpush1.msra.mxu0 %v230
    %296 = vmatprep.subr.mxu0 %v233
    %297 = vmatpush1.msra.mxu0 %v232
    %298 = vmatprep.subr.mxu0 %v235
    %299 = vmatpush1.msra.mxu0 %v234
    %300 = vmatprep.subr.mxu0 %v237
    %301 = vmatpush1.msra.mxu0 %v236
    %302 = vmatprep.subr.mxu0 %v239
    %303 = vmatpush1.msra.mxu0 %v238
    %304 = vmatprep.mubr.f32.mxu0 %v173
    %305 = vmatmul.mubr.f32.gmra.mrb[0].mxu0 %v171
    %v306 = vpop.f32.mrb[0].mxu0
    %v307 = vadd.f32 0.0, %v306
    %v308 = vpop.f32.mrb[0].mxu0
    %v309 = vadd.f32 0.0, %v308
    %310 = vdwg.mxu0
    %s311 = scalar_lea.vmem [#allocation5], 1024
    %v312 = vld [vmem:[%s311] sm:$0xff]
    %v313 = vld [vmem:[%s311 + $0x8] sm:$0xff]
    %v314 = vld [vmem:[%s311 + $0x10] sm:$0xff]
    %v315 = vld [vmem:[%s311 + $0x18] sm:$0xff]
    %v316 = vld [vmem:[%s311 + $0x20] sm:$0xff]
    %v317 = vld [vmem:[%s311 + $0x28] sm:$0xff]
    %v318 = vld [vmem:[%s311 + $0x30] sm:$0xff]
    %v319 = vld [vmem:[%s311 + $0x38] sm:$0xff]
    %v320 = vld [vmem:[%s311 + $0x40] sm:$0xff]
    %v321 = vld [vmem:[%s311 + $0x48] sm:$0xff]
    %v322 = vld [vmem:[%s311 + $0x50] sm:$0xff]
    %v323 = vld [vmem:[%s311 + $0x58] sm:$0xff]
    %v324 = vld [vmem:[%s311 + $0x60] sm:$0xff]
    %v325 = vld [vmem:[%s311 + $0x68] sm:$0xff]
    %v326 = vld [vmem:[%s311 + $0x70] sm:$0xff]
    %v327 = vld [vmem:[%s311 + $0x78] sm:$0xff]
    %v328 = vld [vmem:[%s311 + $0x80] sm:$0xff]
    %v329 = vld [vmem:[%s311 + $0x88] sm:$0xff]
    %v330 = vld [vmem:[%s311 + $0x90] sm:$0xff]
    %v331 = vld [vmem:[%s311 + $0x98] sm:$0xff]
    %v332 = vld [vmem:[%s311 + $0xa0] sm:$0xff]
    %v333 = vld [vmem:[%s311 + $0xa8] sm:$0xff]
    %v334 = vld [vmem:[%s311 + $0xb0] sm:$0xff]
    %v335 = vld [vmem:[%s311 + $0xb8] sm:$0xff]
    %v336 = vld [vmem:[%s311 + $0xc0] sm:$0xff]
    %v337 = vld [vmem:[%s311 + $0xc8] sm:$0xff]
    %v338 = vld [vmem:[%s311 + $0xd0] sm:$0xff]
    %v339 = vld [vmem:[%s311 + $0xd8] sm:$0xff]
    %v340 = vld [vmem:[%s311 + $0xe0] sm:$0xff]
    %v341 = vld [vmem:[%s311 + $0xe8] sm:$0xff]
    %v342 = vld [vmem:[%s311 + $0xf0] sm:$0xff]
    %v343 = vld [vmem:[%s311 + $0xf8] sm:$0xff]
    %v344 = vld [vmem:[%s311 + $0x100] sm:$0xff]
    %v345 = vld [vmem:[%s311 + $0x108] sm:$0xff]
    %v346 = vld [vmem:[%s311 + $0x110] sm:$0xff]
    %v347 = vld [vmem:[%s311 + $0x118] sm:$0xff]
    %v348 = vld [vmem:[%s311 + $0x120] sm:$0xff]
    %v349 = vld [vmem:[%s311 + $0x128] sm:$0xff]
    %v350 = vld [vmem:[%s311 + $0x130] sm:$0xff]
    %v351 = vld [vmem:[%s311 + $0x138] sm:$0xff]
    %v352 = vld [vmem:[%s311 + $0x140] sm:$0xff]
    %v353 = vld [vmem:[%s311 + $0x148] sm:$0xff]
    %v354 = vld [vmem:[%s311 + $0x150] sm:$0xff]
    %v355 = vld [vmem:[%s311 + $0x158] sm:$0xff]
    %v356 = vld [vmem:[%s311 + $0x160] sm:$0xff]
    %v357 = vld [vmem:[%s311 + $0x168] sm:$0xff]
    %v358 = vld [vmem:[%s311 + $0x170] sm:$0xff]
    %v359 = vld [vmem:[%s311 + $0x178] sm:$0xff]
    %v360 = vld [vmem:[%s311 + $0x180] sm:$0xff]
    %v361 = vld [vmem:[%s311 + $0x188] sm:$0xff]
    %v362 = vld [vmem:[%s311 + $0x190] sm:$0xff]
    %v363 = vld [vmem:[%s311 + $0x198] sm:$0xff]
    %v364 = vld [vmem:[%s311 + $0x1a0] sm:$0xff]
    %v365 = vld [vmem:[%s311 + $0x1a8] sm:$0xff]
    %v366 = vld [vmem:[%s311 + $0x1b0] sm:$0xff]
    %v367 = vld [vmem:[%s311 + $0x1b8] sm:$0xff]
    %v368 = vld [vmem:[%s311 + $0x1c0] sm:$0xff]
    %v369 = vld [vmem:[%s311 + $0x1c8] sm:$0xff]
    %v370 = vld [vmem:[%s311 + $0x1d0] sm:$0xff]
    %v371 = vld [vmem:[%s311 + $0x1d8] sm:$0xff]
    %v372 = vld [vmem:[%s311 + $0x1e0] sm:$0xff]
    %v373 = vld [vmem:[%s311 + $0x1e8] sm:$0xff]
    %v374 = vld [vmem:[%s311 + $0x1f0] sm:$0xff]
    %v375 = vld [vmem:[%s311 + $0x1f8] sm:$0xff]
    %376 = vmatprep.subr.mxu0 %v313
    %377 = vmatpush1.msra.mxu0 %v312
    %378 = vmatprep.subr.mxu0 %v315
    %379 = vmatpush1.msra.mxu0 %v314
    %380 = vmatprep.subr.mxu0 %v317
    %381 = vmatpush1.msra.mxu0 %v316
    %382 = vmatprep.subr.mxu0 %v319
    %383 = vmatpush1.msra.mxu0 %v318
    %384 = vmatprep.subr.mxu0 %v321
    %385 = vmatpush1.msra.mxu0 %v320
    %386 = vmatprep.subr.mxu0 %v323
    %387 = vmatpush1.msra.mxu0 %v322
    %388 = vmatprep.subr.mxu0 %v325
    %389 = vmatpush1.msra.mxu0 %v324
    %390 = vmatprep.subr.mxu0 %v327
    %391 = vmatpush1.msra.mxu0 %v326
    %392 = vmatprep.subr.mxu0 %v329
    %393 = vmatpush1.msra.mxu0 %v328
    %394 = vmatprep.subr.mxu0 %v331
    %395 = vmatpush1.msra.mxu0 %v330
    %396 = vmatprep.subr.mxu0 %v333
    %397 = vmatpush1.msra.mxu0 %v332
    %398 = vmatprep.subr.mxu0 %v335
    %399 = vmatpush1.msra.mxu0 %v334
    %400 = vmatprep.subr.mxu0 %v337
    %401 = vmatpush1.msra.mxu0 %v336
    %402 = vmatprep.subr.mxu0 %v339
    %403 = vmatpush1.msra.mxu0 %v338
    %404 = vmatprep.subr.mxu0 %v341
    %405 = vmatpush1.msra.mxu0 %v340
    %406 = vmatprep.subr.mxu0 %v343
    %407 = vmatpush1.msra.mxu0 %v342
    %408 = vmatprep.subr.mxu0 %v345
    %409 = vmatpush1.msra.mxu0 %v344
    %410 = vmatprep.subr.mxu0 %v347
    %411 = vmatpush1.msra.mxu0 %v346
    %412 = vmatprep.subr.mxu0 %v349
    %413 = vmatpush1.msra.mxu0 %v348
    %414 = vmatprep.subr.mxu0 %v351
    %415 = vmatpush1.msra.mxu0 %v350
    %416 = vmatprep.subr.mxu0 %v353
    %417 = vmatpush1.msra.mxu0 %v352
    %418 = vmatprep.subr.mxu0 %v355
    %419 = vmatpush1.msra.mxu0 %v354
    %420 = vmatprep.subr.mxu0 %v357
    %421 = vmatpush1.msra.mxu0 %v356
    %422 = vmatprep.subr.mxu0 %v359
    %423 = vmatpush1.msra.mxu0 %v358
    %424 = vmatprep.subr.mxu0 %v361
    %425 = vmatpush1.msra.mxu0 %v360
    %426 = vmatprep.subr.mxu0 %v363
    %427 = vmatpush1.msra.mxu0 %v362
    %428 = vmatprep.subr.mxu0 %v365
    %429 = vmatpush1.msra.mxu0 %v364
    %430 = vmatprep.subr.mxu0 %v367
    %431 = vmatpush1.msra.mxu0 %v366
    %432 = vmatprep.subr.mxu0 %v369
    %433 = vmatpush1.msra.mxu0 %v368
    %434 = vmatprep.subr.mxu0 %v371
    %435 = vmatpush1.msra.mxu0 %v370
    %436 = vmatprep.subr.mxu0 %v373
    %437 = vmatpush1.msra.mxu0 %v372
    %438 = vmatprep.subr.mxu0 %v375
    %439 = vmatpush1.msra.mxu0 %v374
    %440 = vmatprep.mubr.f32.mxu0 %v309
    %441 = vmatmul.mubr.f32.gmra.mrb[0].mxu0 %v307
    %v442 = vpop.f32.mrb[0].mxu0
    %v443 = vadd.f32 0.0, %v442
    %v444 = vpop.f32.mrb[0].mxu0
    %v445 = vadd.f32 0.0, %v444
    %446 = vdwg.mxu0
    %447 = vst [vmem:[#allocation7] sm:$0xff] %v443
    %448 = vst [vmem:[#allocation7 + $0x8] sm:$0xff] %v445
    // Predicated region
    $region18: #{tpu_custom_call.1} parent=1 // pred_check
      _
    $region19: #{tpu_custom_call.1} parent=1 // pred_check_branch
      %450 = sbr.rel (0) target = $region21
    $region20: #{tpu_custom_call.1} parent=1 // pred_region
      %s452 = ssub.s32 256, 256
      %453 = vsyncadd [#allocation4], %s452
      %s455 = sshll.u32 [#allocation7], 4
      %s456 = int_to_ptr.vmem [resolvable:$true] %s455
      %458 = dma.vmem_to_hbm [thread:$0]  %s456, 256, %s2, [#allocation4]
    $region21: #{tpu_custom_call.1} parent=1 // pred_fallthru
      _
    // Predicated region
    $region22: #{tpu_custom_call.1} parent=1 // pred_check
      _
    $region23: #{tpu_custom_call.1} parent=1 // pred_check_branch
      %460 = sbr.rel (0) target = $region25
    $region24: #{tpu_custom_call.1} parent=1 // pred_region
      %461 = dma.done [#allocation4], 256
    $region25: #{tpu_custom_call.1} parent=1 // pred_fallthru
      _
    %462 = vsyncpa [#allocation3], 1
    %463 = vsyncpa [#allocation6], 1
    %464 = vsyncpa [#allocation4], 1

</llo_original>
